<compile_context>
chip_gen: v5e
topology: v5e:2x2
jax: 0.10.0
libtpu: 0.0.40
codegen_flags: <defaults>
</compile_context>

<pallas_src>
import jax
import jax.numpy as jnp
from jax import lax
from jax.experimental import pallas as pl
from jax.experimental.pallas import tpu as pltpu


def _conv_bn_kernel(a_ref, b_ref, scale_ref, shift_ref, o_ref):
    # a_ref:       (tm, K_pad)     im2col patch rows (zero-padded K tail)
    # b_ref:       (K_pad, C_out)  reshaped conv weights (zero-padded K tail)
    # scale/shift: (1, C_out)      folded conv-bias + BatchNorm affine (per channel)
    acc = jnp.dot(a_ref[...], b_ref[...],
                  preferred_element_type=jnp.float32,
                  precision=lax.Precision.HIGHEST)
    o_ref[...] = (acc * scale_ref[...] + shift_ref[...]).astype(o_ref.dtype)


def downsample_connection_forward(x, conv_w, conv_b, gamma, beta,
                                  running_mean, running_var, eps=1e-5):
    """Conv2d(C_in -> C_out, 3x3, stride=2, padding=1) + BatchNorm2d (inference)."""
    N, C_in, H, W = x.shape
    C_out = conv_w.shape[0]
    KH = KW = 3
    stride, pad = 2, 1
    H_out = (H + 2 * pad - KH) // stride + 1
    W_out = (W + 2 * pad - KW) // stride + 1

    # ---- wrapper layout plumbing: spatial pad + im2col to (M, K) -------------
    x_pad = jnp.pad(x, ((0, 0), (0, 0), (pad, pad), (pad, pad)))
    taps = []
    for kh in range(KH):
        for kw in range(KW):
            taps.append(x_pad[:, :, kh:kh + stride * H_out:stride,
                                     kw:kw + stride * W_out:stride])  # (N,C_in,Ho,Wo)
    # (N, C_in, 9, Ho, Wo) -> (N, Ho, Wo, C_in, 9) -> (M, K); K order = (ci, kh, kw)
    patches = jnp.stack(taps, axis=2).transpose(0, 3, 4, 1, 2)
    M = N * H_out * W_out
    K = C_in * KH * KW
    a = patches.reshape(M, K).astype(jnp.float32)

    # weights -> (K, C_out), same (ci, kh, kw) K-ordering as the patches
    b = conv_w.reshape(C_out, K).T.astype(jnp.float32)

    # Zero-pad the contraction axis to a multiple of 128 so patch rows are
    # lane-dense in VMEM (zeros contribute nothing to the dot product).
    K_pad = ((K + 127) // 128) * 128
    if K_pad != K:
        a = jnp.pad(a, ((0, 0), (0, K_pad - K)))
        b = jnp.pad(b, ((0, K_pad - K), (0, 0)))

    # Row tile: big enough to amortize the ~0.35us per-grid-step overhead,
    # small enough that (tm*K_pad + K_pad*C_out + tm*C_out) f32 double-buffered
    # stays far under the scoped-VMEM default on v5e/v6e/v7x at these channel
    # counts.  Pad M up to a multiple of tm so every block is full (no masked
    # partial stores); the pad rows are sliced off after the call.
    tm = min(512, ((M + 7) // 8) * 8)
    M_pad = pl.cdiv(M, tm) * tm
    if M_pad != M:
        a = jnp.pad(a, ((0, M_pad - M), (0, 0)))

    # Fold conv bias + BN into one per-channel affine (dtype-correct, no weak scalars):
    #   y = ((a@b) + bias - mean) * gamma / sqrt(var + eps) + beta
    #     = (a@b) * scale + shift
    scale = gamma * lax.rsqrt(running_var + jnp.asarray(eps, running_var.dtype))
    shift = (conv_b - running_mean) * scale + beta
    scale2d = scale.reshape(1, C_out).astype(jnp.float32)
    shift2d = shift.reshape(1, C_out).astype(jnp.float32)

    # ---- Pallas GEMM + fused bias/BN epilogue --------------------------------
    grid = (M_pad // tm,)
    out2d = pl.pallas_call(
        _conv_bn_kernel,
        out_shape=jax.ShapeDtypeStruct((M_pad, C_out), x.dtype),
        grid_spec=pltpu.PrefetchScalarGridSpec(
            num_scalar_prefetch=0,
            grid=grid,
            in_specs=[
                pl.BlockSpec((tm, K_pad), lambda i: (i, 0)),      # patches, tiled over rows
                pl.BlockSpec((K_pad, C_out), lambda i: (0, 0)),   # weights, resident
                pl.BlockSpec((1, C_out), lambda i: (0, 0)),       # scale, resident
                pl.BlockSpec((1, C_out), lambda i: (0, 0)),       # shift, resident
            ],
            out_specs=pl.BlockSpec((tm, C_out), lambda i: (i, 0)),
        ),
        compiler_params=pltpu.CompilerParams(
            dimension_semantics=("parallel",)),
    )(a, b, scale2d, shift2d)

    # (M, C_out) -> (N, Ho, Wo, C_out) -> NCHW
    out2d = out2d[:M]
    return out2d.reshape(N, H_out, W_out, C_out).transpose(0, 3, 1, 2)


if __name__ == "__main__":
    key = jax.random.PRNGKey(0)
    kx, kw_, kb, kg, kbe, km, kv = jax.random.split(key, 7)

    N, C_in, H, W = 2, 4, 16, 16
    C_out = 8
    eps = 1e-5

    x = jax.random.normal(kx, (N, C_in, H, W), dtype=jnp.float32)
    conv_w = jax.random.normal(kw_, (C_out, C_in, 3, 3), dtype=jnp.float32) / jnp.sqrt(
        jnp.asarray(C_in * 9, jnp.float32))
    conv_b = 0.1 * jax.random.normal(kb, (C_out,), dtype=jnp.float32)
    gamma = 1.0 + 0.1 * jax.random.normal(kg, (C_out,), dtype=jnp.float32)
    beta = 0.1 * jax.random.normal(kbe, (C_out,), dtype=jnp.float32)
    running_mean = 0.1 * jax.random.normal(km, (C_out,), dtype=jnp.float32)
    running_var = jax.nn.softplus(jax.random.normal(kv, (C_out,), dtype=jnp.float32)) + 0.5

    y = downsample_connection_forward(x, conv_w, conv_b, gamma, beta,
                                      running_mean, running_var, eps)
    jax.block_until_ready(y)

    # Reference: XLA conv + inference-mode BatchNorm
    ref_conv = lax.conv_general_dilated(
        x, conv_w, window_strides=(2, 2), padding=((1, 1), (1, 1)),
        dimension_numbers=("NCHW", "OIHW", "NCHW"),
        precision=lax.Precision.HIGHEST)
    ref_conv = ref_conv + conv_b.reshape(1, C_out, 1, 1)
    inv = (gamma / jnp.sqrt(running_var + eps)).reshape(1, C_out, 1, 1)
    ref = (ref_conv - running_mean.reshape(1, C_out, 1, 1)) * inv + beta.reshape(1, C_out, 1, 1)

    assert y.shape == ref.shape == (N, C_out, H // 2, W // 2)
    assert y.dtype == x.dtype
    assert jnp.allclose(y, ref, atol=1e-3, rtol=1e-3), float(jnp.max(jnp.abs(y - ref)))
    print("KERNEL_OK")
</pallas_src>

<mosaic_0001>
module attributes {stable_mosaic.version = 11 : i64} {
  func.func @_conv_bn_kernel(%arg0: i32, %arg1: memref<128x128xf32, #tpu.memory_space<vmem>>, %arg2: memref<128x8xf32, #tpu.memory_space<vmem>>, %arg3: memref<1x8xf32, #tpu.memory_space<vmem>>, %arg4: memref<1x8xf32, #tpu.memory_space<vmem>>, %arg5: memref<128x8xf32, #tpu.memory_space<vmem>>) attributes {dimension_semantics = [#tpu.dimension_semantics<parallel>], iteration_bounds = array<i64: 1>, scalar_prefetch = 0 : i64, scratch_operands = 0 : i64, tpu.core_type = #tpu.core_type<tc>, window_params = [{transform_indices = @transform_0, window_bounds = array<i64: 128, 128>}, {pipeline_mode = #tpu.pipeline_mode<synchronous>, transform_indices = @transform_1, window_bounds = array<i64: 128, 8>}, {pipeline_mode = #tpu.pipeline_mode<synchronous>, transform_indices = @transform_2, window_bounds = array<i64: 1, 8>}, {pipeline_mode = #tpu.pipeline_mode<synchronous>, transform_indices = @transform_3, window_bounds = array<i64: 1, 8>}, {transform_indices = @transform_4, window_bounds = array<i64: 128, 8>}]} {
    %c0 = arith.constant 0 : index
    %c0_0 = arith.constant 0 : index
    %0 = vector.load %arg1[%c0, %c0_0] : memref<128x128xf32, #tpu.memory_space<vmem>>, vector<128x128xf32>
    %c0_1 = arith.constant 0 : index
    %c0_2 = arith.constant 0 : index
    %1 = vector.load %arg2[%c0_1, %c0_2] : memref<128x8xf32, #tpu.memory_space<vmem>>, vector<128x8xf32>
    %cst = arith.constant dense<0.000000e+00> : vector<128x8xf32>
    %2 = tpu.matmul %0, %1, %cst {dimension_numbers = #tpu.dot_dimension_numbers<[1], [0], [0], [1], [0, 0, 1, 1], [], []>, precision = #tpu.contract_precision<fp32>} : vector<128x128xf32>, vector<128x8xf32>, vector<128x8xf32> -> vector<128x8xf32>
    %c0_3 = arith.constant 0 : index
    %c0_4 = arith.constant 0 : index
    %3 = vector.load %arg3[%c0_3, %c0_4] : memref<1x8xf32, #tpu.memory_space<vmem>>, vector<1x8xf32>
    %4 = vector.broadcast %3 : vector<1x8xf32> to vector<128x8xf32>
    %5 = arith.mulf %2, %4 : vector<128x8xf32>
    %c0_5 = arith.constant 0 : index
    %c0_6 = arith.constant 0 : index
    %6 = vector.load %arg4[%c0_5, %c0_6] : memref<1x8xf32, #tpu.memory_space<vmem>>, vector<1x8xf32>
    %7 = vector.broadcast %6 : vector<1x8xf32> to vector<128x8xf32>
    %8 = arith.addf %5, %7 : vector<128x8xf32>
    %c0_7 = arith.constant 0 : index
    %c0_8 = arith.constant 0 : index
    %9 = vector.load %arg5[%c0_7, %c0_8] : memref<128x8xf32, #tpu.memory_space<vmem>>, vector<128x8xf32>
    tpu.vector_store %arg5[%c0_7, %c0_8], %8 {strides = array<i32>} : memref<128x8xf32, #tpu.memory_space<vmem>>, vector<128x8xf32>,
    return
  }
  func.func @transform_0(%arg0: i32) -> (i32, i32) {
    %c0_i32 = arith.constant 0 : i32
    %c0_i32_0 = arith.constant 0 : i32
    return %arg0, %c0_i32 : i32, i32
  }
  func.func @transform_1(%arg0: i32) -> (i32, i32) {
    %c0_i32 = arith.constant 0 : i32
    %c0_i32_0 = arith.constant 0 : i32
    %c0_i32_1 = arith.constant 0 : i32
    return %c0_i32, %c0_i32_0 : i32, i32
  }
  func.func @transform_2(%arg0: i32) -> (i32, i32) {
    %c0_i32 = arith.constant 0 : i32
    %c0_i32_0 = arith.constant 0 : i32
    %c0_i32_1 = arith.constant 0 : i32
    return %c0_i32, %c0_i32_0 : i32, i32
  }
  func.func @transform_3(%arg0: i32) -> (i32, i32) {
    %c0_i32 = arith.constant 0 : i32
    %c0_i32_0 = arith.constant 0 : i32
    %c0_i32_1 = arith.constant 0 : i32
    return %c0_i32, %c0_i32_0 : i32, i32
  }
  func.func @transform_4(%arg0: i32) -> (i32, i32) {
    %c0_i32 = arith.constant 0 : i32
    %c0_i32_0 = arith.constant 0 : i32
    return %arg0, %c0_i32 : i32, i32
  }
}

</mosaic_0001>

<llo_original>
// kernel: tpu_custom_call.1
$region0: #{tpu_custom_call.1}
  #allocation0 [shape = 'u32[]', space=smem, size = 0x4, offset = 0x4, fixed_abs, tag = 'smem constant byte address 0x4 - core index']
  #allocation1 [shape = 'u32[72,128]{1,0:T(1,128)}', space=vmem, size = 0x9000, scoped, tag = 'internal scratch']
  %s0 = inlined_call_operand.vmem [shape: f32[128,128], index: 0, kind: input, shape index: {}]
  %s1 = inlined_call_operand.vmem [shape: f32[128,8], index: 1, kind: input, shape index: {}]
  %s2 = inlined_call_operand.vmem [shape: f32[1,8], index: 2, kind: input, shape index: {}]
  %s3 = inlined_call_operand.vmem [shape: f32[1,8], index: 3, kind: input, shape index: {}]
  %s4 = inlined_call_operand.vmem [shape: f32[128,8], index: 4, kind: output, shape index: {}]
  %s5 = sld [smem:[#allocation0]]
  $region26: #{tpu_custom_call.1} parent=0
    _
  %s7 = ssub.s32 1, %s5
  %s8 = scalar_select 0, %s7, %s5
  // Predicated region
  $region2: #{tpu_custom_call.1} parent=0 // pred_check
    _
  $region3: #{tpu_custom_call.1} parent=0 // pred_check_branch
    %10 = sbr.rel (0) target = $region5
  $region4: #{tpu_custom_call.1} parent=0 // pred_region
    _
  $region5: #{tpu_custom_call.1} parent=0 // pred_fallthru
    _
  // Predicated region
  $region6: #{tpu_custom_call.1} parent=0 // pred_check
    _
  $region7: #{tpu_custom_call.1} parent=0 // pred_check_branch
    %12 = sbr.rel (0) target = $region9
  $region8: #{tpu_custom_call.1} parent=0 // pred_region
    _
  $region9: #{tpu_custom_call.1} parent=0 // pred_fallthru
    _
  // Predicated region
  $region10: #{tpu_custom_call.1} parent=0 // pred_check
    _
  $region11: #{tpu_custom_call.1} parent=0 // pred_check_branch
    %14 = sbr.rel (0) target = $region13
  $region12: #{tpu_custom_call.1} parent=0 // pred_region
    _
  $region13: #{tpu_custom_call.1} parent=0 // pred_fallthru
    _
  // Predicated region
  $region14: #{tpu_custom_call.1} parent=0 // pred_check
    _
  $region15: #{tpu_custom_call.1} parent=0 // pred_check_branch
    %16 = sbr.rel (0) target = $region17
  $region16: #{tpu_custom_call.1} parent=0 // pred_region
    _
  $region17: #{tpu_custom_call.1} parent=0 // pred_fallthru
    _
  %v17 = vld [vmem:[%s0] sm:$0xff]
  %v18 = vld [vmem:[%s0 + $0x8] sm:$0xff]
  %v19 = vld [vmem:[%s0 + $0x10] sm:$0xff]
  %v20 = vld [vmem:[%s0 + $0x18] sm:$0xff]
  %v21 = vld [vmem:[%s0 + $0x20] sm:$0xff]
  %v22 = vld [vmem:[%s0 + $0x28] sm:$0xff]
  %v23 = vld [vmem:[%s0 + $0x30] sm:$0xff]
  %v24 = vld [vmem:[%s0 + $0x38] sm:$0xff]
  %v25 = vld [vmem:[%s0 + $0x40] sm:$0xff]
  %v26 = vld [vmem:[%s0 + $0x48] sm:$0xff]
  %v27 = vld [vmem:[%s0 + $0x50] sm:$0xff]
  %v28 = vld [vmem:[%s0 + $0x58] sm:$0xff]
  %v29 = vld [vmem:[%s0 + $0x60] sm:$0xff]
  %v30 = vld [vmem:[%s0 + $0x68] sm:$0xff]
  %v31 = vld [vmem:[%s0 + $0x70] sm:$0xff]
  %v32 = vld [vmem:[%s0 + $0x78] sm:$0xff]
  %v33 = vld [vmem:[%s1] sm:$0xff]
  %v34 = vld [vmem:[%s1 + $0x8] sm:$0xff]
  %v35 = vld [vmem:[%s1 + $0x10] sm:$0xff]
  %v36 = vld [vmem:[%s1 + $0x18] sm:$0xff]
  %v37 = vld [vmem:[%s1 + $0x20] sm:$0xff]
  %v38 = vld [vmem:[%s1 + $0x28] sm:$0xff]
  %v39 = vld [vmem:[%s1 + $0x30] sm:$0xff]
  %v40 = vld [vmem:[%s1 + $0x38] sm:$0xff]
  %v41 = vld [vmem:[%s1 + $0x40] sm:$0xff]
  %v42 = vld [vmem:[%s1 + $0x48] sm:$0xff]
  %v43 = vld [vmem:[%s1 + $0x50] sm:$0xff]
  %v44 = vld [vmem:[%s1 + $0x58] sm:$0xff]
  %v45 = vld [vmem:[%s1 + $0x60] sm:$0xff]
  %v46 = vld [vmem:[%s1 + $0x68] sm:$0xff]
  %v47 = vld [vmem:[%s1 + $0x70] sm:$0xff]
  %v48 = vld [vmem:[%s1 + $0x78] sm:$0xff]
  %v49 = vand.u32 %v48, 4294901760
  %50 = vmatpush.msra.mxu0 %v49
  %v51 = vand.u32 %v47, 4294901760
  %52 = vmatpush.msra.mxu0 %v51
  %v53 = vand.u32 %v46, 4294901760
  %54 = vmatpush.msra.mxu0 %v53
  %v55 = vand.u32 %v45, 4294901760
  %56 = vmatpush.msra.mxu0 %v55
  %v57 = vand.u32 %v44, 4294901760
  %58 = vmatpush.msra.mxu0 %v57
  %v59 = vand.u32 %v43, 4294901760
  %60 = vmatpush.msra.mxu0 %v59
  %v61 = vand.u32 %v42, 4294901760
  %62 = vmatpush.msra.mxu0 %v61
  %v63 = vand.u32 %v41, 4294901760
  %64 = vmatpush.msra.mxu0 %v63
  %v65 = vand.u32 %v40, 4294901760
  %66 = vmatpush.msra.mxu0 %v65
  %v67 = vand.u32 %v39, 4294901760
  %68 = vmatpush.msra.mxu0 %v67
  %v69 = vand.u32 %v38, 4294901760
  %70 = vmatpush.msra.mxu0 %v69
  %v71 = vand.u32 %v37, 4294901760
  %72 = vmatpush.msra.mxu0 %v71
  %v73 = vand.u32 %v36, 4294901760
  %74 = vmatpush.msra.mxu0 %v73
  %v75 = vand.u32 %v35, 4294901760
  %76 = vmatpush.msra.mxu0 %v75
  %v77 = vand.u32 %v34, 4294901760
  %78 = vmatpush.msra.mxu0 %v77
  %v79 = vand.u32 %v33, 4294901760
  %80 = vmatpush.msra.mxu0 %v79
  %v81 = vand.u32 %v17, 4294901760
  %v82 = vsub.f32 %v17, %v81
  %v83 = vand.u32 %v82, 4294901760
  %v84 = vsub.f32 %v82, %v83
  %v85 = vand.u32 %v84, 4294901760
  %86 = vmatmul.f32.gmra.mxu0 %v85
  %v87 = vpop.f32.mrf.mxu0
  %v88 = vadd.f32 0.0, %v87
  %v89 = vand.u32 %v18, 4294901760
  %v90 = vsub.f32 %v18, %v89
  %v91 = vand.u32 %v90, 4294901760
  %v92 = vsub.f32 %v90, %v91
  %v93 = vand.u32 %v92, 4294901760
  %94 = vmatmul.f32.gmra.mxu0 %v93
  %v95 = vpop.f32.mrf.mxu0
  %v96 = vadd.f32 0.0, %v95
  %v97 = vand.u32 %v19, 4294901760
  %v98 = vsub.f32 %v19, %v97
  %v99 = vand.u32 %v98, 4294901760
  %v100 = vsub.f32 %v98, %v99
  %v101 = vand.u32 %v100, 4294901760
  %102 = vmatmul.f32.gmra.mxu0 %v101
  %v103 = vpop.f32.mrf.mxu0
  %v104 = vadd.f32 0.0, %v103
  %v105 = vand.u32 %v20, 4294901760
  %v106 = vsub.f32 %v20, %v105
  %v107 = vand.u32 %v106, 4294901760
  %v108 = vsub.f32 %v106, %v107
  %v109 = vand.u32 %v108, 4294901760
  %110 = vmatmul.f32.gmra.mxu0 %v109
  %v111 = vpop.f32.mrf.mxu0
  %v112 = vadd.f32 0.0, %v111
  %v113 = vand.u32 %v21, 4294901760
  %v114 = vsub.f32 %v21, %v113
  %v115 = vand.u32 %v114, 4294901760
  %v116 = vsub.f32 %v114, %v115
  %v117 = vand.u32 %v116, 4294901760
  %118 = vmatmul.f32.gmra.mxu0 %v117
  %v119 = vpop.f32.mrf.mxu0
  %v120 = vadd.f32 0.0, %v119
  %v121 = vand.u32 %v22, 4294901760
  %v122 = vsub.f32 %v22, %v121
  %v123 = vand.u32 %v122, 4294901760
  %v124 = vsub.f32 %v122, %v123
  %v125 = vand.u32 %v124, 4294901760
  %126 = vmatmul.f32.gmra.mxu0 %v125
  %v127 = vpop.f32.mrf.mxu0
  %v128 = vadd.f32 0.0, %v127
  %v129 = vand.u32 %v23, 4294901760
  %v130 = vsub.f32 %v23, %v129
  %v131 = vand.u32 %v130, 4294901760
  %v132 = vsub.f32 %v130, %v131
  %v133 = vand.u32 %v132, 4294901760
  %134 = vmatmul.f32.gmra.mxu0 %v133
  %v135 = vpop.f32.mrf.mxu0
  %v136 = vadd.f32 0.0, %v135
  %v137 = vand.u32 %v24, 4294901760
  %v138 = vsub.f32 %v24, %v137
  %v139 = vand.u32 %v138, 4294901760
  %v140 = vsub.f32 %v138, %v139
  %v141 = vand.u32 %v140, 4294901760
  %142 = vmatmul.f32.gmra.mxu0 %v141
  %v143 = vpop.f32.mrf.mxu0
  %v144 = vadd.f32 0.0, %v143
  %v145 = vand.u32 %v25, 4294901760
  %v146 = vsub.f32 %v25, %v145
  %v147 = vand.u32 %v146, 4294901760
  %v148 = vsub.f32 %v146, %v147
  %v149 = vand.u32 %v148, 4294901760
  %150 = vmatmul.f32.gmra.mxu0 %v149
  %v151 = vpop.f32.mrf.mxu0
  %v152 = vadd.f32 0.0, %v151
  %v153 = vand.u32 %v26, 4294901760
  %v154 = vsub.f32 %v26, %v153
  %v155 = vand.u32 %v154, 4294901760
  %v156 = vsub.f32 %v154, %v155
  %v157 = vand.u32 %v156, 4294901760
  %158 = vmatmul.f32.gmra.mxu0 %v157
  %v159 = vpop.f32.mrf.mxu0
  %v160 = vadd.f32 0.0, %v159
  %v161 = vand.u32 %v27, 4294901760
  %v162 = vsub.f32 %v27, %v161
  %v163 = vand.u32 %v162, 4294901760
  %v164 = vsub.f32 %v162, %v163
  %v165 = vand.u32 %v164, 4294901760
  %166 = vmatmul.f32.gmra.mxu0 %v165
  %v167 = vpop.f32.mrf.mxu0
  %v168 = vadd.f32 0.0, %v167
  %v169 = vand.u32 %v28, 4294901760
  %v170 = vsub.f32 %v28, %v169
  %v171 = vand.u32 %v170, 4294901760
  %v172 = vsub.f32 %v170, %v171
  %v173 = vand.u32 %v172, 4294901760
  %174 = vmatmul.f32.gmra.mxu0 %v173
  %v175 = vpop.f32.mrf.mxu0
  %v176 = vadd.f32 0.0, %v175
  %v177 = vand.u32 %v29, 4294901760
  %v178 = vsub.f32 %v29, %v177
  %v179 = vand.u32 %v178, 4294901760
  %v180 = vsub.f32 %v178, %v179
  %v181 = vand.u32 %v180, 4294901760
  %182 = vmatmul.f32.gmra.mxu0 %v181
  %v183 = vpop.f32.mrf.mxu0
  %v184 = vadd.f32 0.0, %v183
  %v185 = vand.u32 %v30, 4294901760
  %v186 = vsub.f32 %v30, %v185
  %v187 = vand.u32 %v186, 4294901760
  %v188 = vsub.f32 %v186, %v187
  %v189 = vand.u32 %v188, 4294901760
  %190 = vmatmul.f32.gmra.mxu0 %v189
  %v191 = vpop.f32.mrf.mxu0
  %v192 = vadd.f32 0.0, %v191
  %v193 = vand.u32 %v31, 4294901760
  %v194 = vsub.f32 %v31, %v193
  %v195 = vand.u32 %v194, 4294901760
  %v196 = vsub.f32 %v194, %v195
  %v197 = vand.u32 %v196, 4294901760
  %198 = vmatmul.f32.gmra.mxu0 %v197
  %v199 = vpop.f32.mrf.mxu0
  %v200 = vadd.f32 0.0, %v199
  %v201 = vand.u32 %v32, 4294901760
  %v202 = vsub.f32 %v32, %v201
  %v203 = vand.u32 %v202, 4294901760
  %v204 = vsub.f32 %v202, %v203
  %v205 = vand.u32 %v204, 4294901760
  %206 = vmatmul.f32.gmra.mxu0 %v205
  %v207 = vpop.f32.mrf.mxu0
  %v208 = vadd.f32 0.0, %v207
  %209 = vdwg.mxu0
  %v210 = vand.u32 %v48, 4294901760
  %v211 = vsub.f32 %v48, %v210
  %v212 = vand.u32 %v211, 4294901760
  %v213 = vsub.f32 %v211, %v212
  %v214 = vand.u32 %v213, 4294901760
  %215 = vmatpush.msra.mxu0 %v214
  %v216 = vand.u32 %v47, 4294901760
  %v217 = vsub.f32 %v47, %v216
  %v218 = vand.u32 %v217, 4294901760
  %v219 = vsub.f32 %v217, %v218
  %v220 = vand.u32 %v219, 4294901760
  %221 = vmatpush.msra.mxu0 %v220
  %v222 = vand.u32 %v46, 4294901760
  %v223 = vsub.f32 %v46, %v222
  %v224 = vand.u32 %v223, 4294901760
  %v225 = vsub.f32 %v223, %v224
  %v226 = vand.u32 %v225, 4294901760
  %227 = vmatpush.msra.mxu0 %v226
  %v228 = vand.u32 %v45, 4294901760
  %v229 = vsub.f32 %v45, %v228
  %v230 = vand.u32 %v229, 4294901760
  %v231 = vsub.f32 %v229, %v230
  %v232 = vand.u32 %v231, 4294901760
  %233 = vmatpush.msra.mxu0 %v232
  %v234 = vand.u32 %v44, 4294901760
  %v235 = vsub.f32 %v44, %v234
  %v236 = vand.u32 %v235, 4294901760
  %v237 = vsub.f32 %v235, %v236
  %v238 = vand.u32 %v237, 4294901760
  %239 = vmatpush.msra.mxu0 %v238
  %v240 = vand.u32 %v43, 4294901760
  %v241 = vsub.f32 %v43, %v240
  %v242 = vand.u32 %v241, 4294901760
  %v243 = vsub.f32 %v241, %v242
  %v244 = vand.u32 %v243, 4294901760
  %245 = vmatpush.msra.mxu0 %v244
  %v246 = vand.u32 %v42, 4294901760
  %v247 = vsub.f32 %v42, %v246
  %v248 = vand.u32 %v247, 4294901760
  %v249 = vsub.f32 %v247, %v248
  %v250 = vand.u32 %v249, 4294901760
  %251 = vmatpush.msra.mxu0 %v250
  %v252 = vand.u32 %v41, 4294901760
  %v253 = vsub.f32 %v41, %v252
  %v254 = vand.u32 %v253, 4294901760
  %v255 = vsub.f32 %v253, %v254
  %v256 = vand.u32 %v255, 4294901760
  %257 = vmatpush.msra.mxu0 %v256
  %v258 = vand.u32 %v40, 4294901760
  %v259 = vsub.f32 %v40, %v258
  %v260 = vand.u32 %v259, 4294901760
  %v261 = vsub.f32 %v259, %v260
  %v262 = vand.u32 %v261, 4294901760
  %263 = vmatpush.msra.mxu0 %v262
  %v264 = vand.u32 %v39, 4294901760
  %v265 = vsub.f32 %v39, %v264
  %v266 = vand.u32 %v265, 4294901760
  %v267 = vsub.f32 %v265, %v266
  %v268 = vand.u32 %v267, 4294901760
  %269 = vmatpush.msra.mxu0 %v268
  %v270 = vand.u32 %v38, 4294901760
  %v271 = vsub.f32 %v38, %v270
  %v272 = vand.u32 %v271, 4294901760
  %v273 = vsub.f32 %v271, %v272
  %v274 = vand.u32 %v273, 4294901760
  %275 = vmatpush.msra.mxu0 %v274
  %v276 = vand.u32 %v37, 4294901760
  %v277 = vsub.f32 %v37, %v276
  %v278 = vand.u32 %v277, 4294901760
  %v279 = vsub.f32 %v277, %v278
  %v280 = vand.u32 %v279, 4294901760
  %281 = vmatpush.msra.mxu0 %v280
  %v282 = vand.u32 %v36, 4294901760
  %v283 = vsub.f32 %v36, %v282
  %v284 = vand.u32 %v283, 4294901760
  %v285 = vsub.f32 %v283, %v284
  %v286 = vand.u32 %v285, 4294901760
  %287 = vmatpush.msra.mxu0 %v286
  %v288 = vand.u32 %v35, 4294901760
  %v289 = vsub.f32 %v35, %v288
  %v290 = vand.u32 %v289, 4294901760
  %v291 = vsub.f32 %v289, %v290
  %v292 = vand.u32 %v291, 4294901760
  %293 = vmatpush.msra.mxu0 %v292
  %v294 = vand.u32 %v34, 4294901760
  %v295 = vsub.f32 %v34, %v294
  %v296 = vand.u32 %v295, 4294901760
  %v297 = vsub.f32 %v295, %v296
  %v298 = vand.u32 %v297, 4294901760
  %299 = vmatpush.msra.mxu0 %v298
  %v300 = vand.u32 %v33, 4294901760
  %v301 = vsub.f32 %v33, %v300
  %v302 = vand.u32 %v301, 4294901760
  %v303 = vsub.f32 %v301, %v302
  %v304 = vand.u32 %v303, 4294901760
  %305 = vmatpush.msra.mxu0 %v304
  %v306 = vand.u32 %v17, 4294901760
  %307 = vmatmul.f32.gmra.mxu0 %v306
  %v308 = vpop.f32.mrf.mxu0
  %v309 = vadd.f32 %v88, %v308
  %v310 = vand.u32 %v18, 4294901760
  %311 = vmatmul.f32.gmra.mxu0 %v310
  %v312 = vpop.f32.mrf.mxu0
  %v313 = vadd.f32 %v96, %v312
  %v314 = vand.u32 %v19, 4294901760
  %315 = vmatmul.f32.gmra.mxu0 %v314
  %v316 = vpop.f32.mrf.mxu0
  %v317 = vadd.f32 %v104, %v316
  %v318 = vand.u32 %v20, 4294901760
  %319 = vmatmul.f32.gmra.mxu0 %v318
  %v320 = vpop.f32.mrf.mxu0
  %v321 = vadd.f32 %v112, %v320
  %v322 = vand.u32 %v21, 4294901760
  %323 = vmatmul.f32.gmra.mxu0 %v322
  %v324 = vpop.f32.mrf.mxu0
  %v325 = vadd.f32 %v120, %v324
  %v326 = vand.u32 %v22, 4294901760
  %327 = vmatmul.f32.gmra.mxu0 %v326
  %v328 = vpop.f32.mrf.mxu0
  %v329 = vadd.f32 %v128, %v328
  %v330 = vand.u32 %v23, 4294901760
  %331 = vmatmul.f32.gmra.mxu0 %v330
  %v332 = vpop.f32.mrf.mxu0
  %v333 = vadd.f32 %v136, %v332
  %v334 = vand.u32 %v24, 4294901760
  %335 = vmatmul.f32.gmra.mxu0 %v334
  %v336 = vpop.f32.mrf.mxu0
  %v337 = vadd.f32 %v144, %v336
  %v338 = vand.u32 %v25, 4294901760
  %339 = vmatmul.f32.gmra.mxu0 %v338
  %v340 = vpop.f32.mrf.mxu0
  %v341 = vadd.f32 %v152, %v340
  %v342 = vand.u32 %v26, 4294901760
  %343 = vmatmul.f32.gmra.mxu0 %v342
  %v344 = vpop.f32.mrf.mxu0
  %v345 = vadd.f32 %v160, %v344
  %v346 = vand.u32 %v27, 4294901760
  %347 = vmatmul.f32.gmra.mxu0 %v346
  %v348 = vpop.f32.mrf.mxu0
  %v349 = vadd.f32 %v168, %v348
  %v350 = vand.u32 %v28, 4294901760
  %351 = vmatmul.f32.gmra.mxu0 %v350
  %v352 = vpop.f32.mrf.mxu0
  %v353 = vadd.f32 %v176, %v352
  %v354 = vand.u32 %v29, 4294901760
  %355 = vmatmul.f32.gmra.mxu0 %v354
  %v356 = vpop.f32.mrf.mxu0
  %v357 = vadd.f32 %v184, %v356
  %v358 = vand.u32 %v30, 4294901760
  %359 = vmatmul.f32.gmra.mxu0 %v358
  %v360 = vpop.f32.mrf.mxu0
  %v361 = vadd.f32 %v192, %v360
  %v362 = vand.u32 %v31, 4294901760
  %363 = vmatmul.f32.gmra.mxu0 %v362
  %v364 = vpop.f32.mrf.mxu0
  %v365 = vadd.f32 %v200, %v364
  %v366 = vand.u32 %v32, 4294901760
  %367 = vmatmul.f32.gmra.mxu0 %v366
  %v368 = vpop.f32.mrf.mxu0
  %v369 = vadd.f32 %v208, %v368
  %370 = vdwg.mxu0
  %v371 = vand.u32 %v48, 4294901760
  %v372 = vsub.f32 %v48, %v371
  %373 = vmatpush.msra.mxu0 %v372
  %v374 = vand.u32 %v47, 4294901760
  %v375 = vsub.f32 %v47, %v374
  %376 = vmatpush.msra.mxu0 %v375
  %v377 = vand.u32 %v46, 4294901760
  %v378 = vsub.f32 %v46, %v377
  %379 = vmatpush.msra.mxu0 %v378
  %v380 = vand.u32 %v45, 4294901760
  %v381 = vsub.f32 %v45, %v380
  %382 = vmatpush.msra.mxu0 %v381
  %v383 = vand.u32 %v44, 4294901760
  %v384 = vsub.f32 %v44, %v383
  %385 = vmatpush.msra.mxu0 %v384
  %v386 = vand.u32 %v43, 4294901760
  %v387 = vsub.f32 %v43, %v386
  %388 = vmatpush.msra.mxu0 %v387
  %v389 = vand.u32 %v42, 4294901760
  %v390 = vsub.f32 %v42, %v389
  %391 = vmatpush.msra.mxu0 %v390
  %v392 = vand.u32 %v41, 4294901760
  %v393 = vsub.f32 %v41, %v392
  %394 = vmatpush.msra.mxu0 %v393
  %v395 = vand.u32 %v40, 4294901760
  %v396 = vsub.f32 %v40, %v395
  %397 = vmatpush.msra.mxu0 %v396
  %v398 = vand.u32 %v39, 4294901760
  %v399 = vsub.f32 %v39, %v398
  %400 = vmatpush.msra.mxu0 %v399
  %v401 = vand.u32 %v38, 4294901760
  %v402 = vsub.f32 %v38, %v401
  %403 = vmatpush.msra.mxu0 %v402
  %v404 = vand.u32 %v37, 4294901760
  %v405 = vsub.f32 %v37, %v404
  %406 = vmatpush.msra.mxu0 %v405
  %v407 = vand.u32 %v36, 4294901760
  %v408 = vsub.f32 %v36, %v407
  %409 = vmatpush.msra.mxu0 %v408
  %v410 = vand.u32 %v35, 4294901760
  %v411 = vsub.f32 %v35, %v410
  %412 = vmatpush.msra.mxu0 %v411
  %v413 = vand.u32 %v34, 4294901760
  %v414 = vsub.f32 %v34, %v413
  %415 = vmatpush.msra.mxu0 %v414
  %v416 = vand.u32 %v33, 4294901760
  %v417 = vsub.f32 %v33, %v416
  %418 = vmatpush.msra.mxu0 %v417
  %v419 = vand.u32 %v17, 4294901760
  %v420 = vsub.f32 %v17, %v419
  %421 = vmatmul.f32.gmra.mxu0 %v420
  %v422 = vpop.f32.mrf.mxu0
  %v423 = vadd.f32 %v309, %v422
  %v424 = vand.u32 %v18, 4294901760
  %v425 = vsub.f32 %v18, %v424
  %426 = vmatmul.f32.gmra.mxu0 %v425
  %v427 = vpop.f32.mrf.mxu0
  %v428 = vadd.f32 %v313, %v427
  %v429 = vand.u32 %v19, 4294901760
  %v430 = vsub.f32 %v19, %v429
  %431 = vmatmul.f32.gmra.mxu0 %v430
  %v432 = vpop.f32.mrf.mxu0
  %v433 = vadd.f32 %v317, %v432
  %v434 = vand.u32 %v20, 4294901760
  %v435 = vsub.f32 %v20, %v434
  %436 = vmatmul.f32.gmra.mxu0 %v435
  %v437 = vpop.f32.mrf.mxu0
  %v438 = vadd.f32 %v321, %v437
  %v439 = vand.u32 %v21, 4294901760
  %v440 = vsub.f32 %v21, %v439
  %441 = vmatmul.f32.gmra.mxu0 %v440
  %v442 = vpop.f32.mrf.mxu0
  %v443 = vadd.f32 %v325, %v442
  %v444 = vand.u32 %v22, 4294901760
  %v445 = vsub.f32 %v22, %v444
  %446 = vmatmul.f32.gmra.mxu0 %v445
  %v447 = vpop.f32.mrf.mxu0
  %v448 = vadd.f32 %v329, %v447
  %v449 = vand.u32 %v23, 4294901760
  %v450 = vsub.f32 %v23, %v449
  %451 = vmatmul.f32.gmra.mxu0 %v450
  %v452 = vpop.f32.mrf.mxu0
  %v453 = vadd.f32 %v333, %v452
  %v454 = vand.u32 %v24, 4294901760
  %v455 = vsub.f32 %v24, %v454
  %456 = vmatmul.f32.gmra.mxu0 %v455
  %v457 = vpop.f32.mrf.mxu0
  %v458 = vadd.f32 %v337, %v457
  %v459 = vand.u32 %v25, 4294901760
  %v460 = vsub.f32 %v25, %v459
  %461 = vmatmul.f32.gmra.mxu0 %v460
  %v462 = vpop.f32.mrf.mxu0
  %v463 = vadd.f32 %v341, %v462
  %v464 = vand.u32 %v26, 4294901760
  %v465 = vsub.f32 %v26, %v464
  %466 = vmatmul.f32.gmra.mxu0 %v465
  %v467 = vpop.f32.mrf.mxu0
  %v468 = vadd.f32 %v345, %v467
  %v469 = vand.u32 %v27, 4294901760
  %v470 = vsub.f32 %v27, %v469
  %471 = vmatmul.f32.gmra.mxu0 %v470
  %v472 = vpop.f32.mrf.mxu0
  %v473 = vadd.f32 %v349, %v472
  %v474 = vand.u32 %v28, 4294901760
  %v475 = vsub.f32 %v28, %v474
  %476 = vmatmul.f32.gmra.mxu0 %v475
  %v477 = vpop.f32.mrf.mxu0
  %v478 = vadd.f32 %v353, %v477
  %v479 = vand.u32 %v29, 4294901760
  %v480 = vsub.f32 %v29, %v479
  %481 = vmatmul.f32.gmra.mxu0 %v480
  %v482 = vpop.f32.mrf.mxu0
  %v483 = vadd.f32 %v357, %v482
  %v484 = vand.u32 %v30, 4294901760
  %v485 = vsub.f32 %v30, %v484
  %486 = vmatmul.f32.gmra.mxu0 %v485
  %v487 = vpop.f32.mrf.mxu0
  %v488 = vadd.f32 %v361, %v487
  %v489 = vand.u32 %v31, 4294901760
  %v490 = vsub.f32 %v31, %v489
  %491 = vmatmul.f32.gmra.mxu0 %v490
  %v492 = vpop.f32.mrf.mxu0
  %v493 = vadd.f32 %v365, %v492
  %v494 = vand.u32 %v32, 4294901760
  %v495 = vsub.f32 %v32, %v494
  %496 = vmatmul.f32.gmra.mxu0 %v495
  %v497 = vpop.f32.mrf.mxu0
  %v498 = vadd.f32 %v369, %v497
  %499 = vdwg.mxu0
  %v500 = vand.u32 %v48, 4294901760
  %501 = vmatpush.msra.mxu0 %v500
  %v502 = vand.u32 %v47, 4294901760
  %503 = vmatpush.msra.mxu0 %v502
  %v504 = vand.u32 %v46, 4294901760
  %505 = vmatpush.msra.mxu0 %v504
  %v506 = vand.u32 %v45, 4294901760
  %507 = vmatpush.msra.mxu0 %v506
  %v508 = vand.u32 %v44, 4294901760
  %509 = vmatpush.msra.mxu0 %v508
  %v510 = vand.u32 %v43, 4294901760
  %511 = vmatpush.msra.mxu0 %v510
  %v512 = vand.u32 %v42, 4294901760
  %513 = vmatpush.msra.mxu0 %v512
  %v514 = vand.u32 %v41, 4294901760
  %515 = vmatpush.msra.mxu0 %v514
  %v516 = vand.u32 %v40, 4294901760
  %517 = vmatpush.msra.mxu0 %v516
  %v518 = vand.u32 %v39, 4294901760
  %519 = vmatpush.msra.mxu0 %v518
  %v520 = vand.u32 %v38, 4294901760
  %521 = vmatpush.msra.mxu0 %v520
  %v522 = vand.u32 %v37, 4294901760
  %523 = vmatpush.msra.mxu0 %v522
  %v524 = vand.u32 %v36, 4294901760
  %525 = vmatpush.msra.mxu0 %v524
  %v526 = vand.u32 %v35, 4294901760
  %527 = vmatpush.msra.mxu0 %v526
  %v528 = vand.u32 %v34, 4294901760
  %529 = vmatpush.msra.mxu0 %v528
  %v530 = vand.u32 %v33, 4294901760
  %531 = vmatpush.msra.mxu0 %v530
  %v532 = vand.u32 %v17, 4294901760
  %v533 = vsub.f32 %v17, %v532
  %v534 = vand.u32 %v533, 4294901760
  %535 = vmatmul.f32.gmra.mxu0 %v534
  %v536 = vpop.f32.mrf.mxu0
  %v537 = vadd.f32 %v423, %v536
  %v538 = vand.u32 %v18, 4294901760
  %v539 = vsub.f32 %v18, %v538
  %v540 = vand.u32 %v539, 4294901760
  %541 = vmatmul.f32.gmra.mxu0 %v540
  %v542 = vpop.f32.mrf.mxu0
  %v543 = vadd.f32 %v428, %v542
  %v544 = vand.u32 %v19, 4294901760
  %v545 = vsub.f32 %v19, %v544
  %v546 = vand.u32 %v545, 4294901760
  %547 = vmatmul.f32.gmra.mxu0 %v546
  %v548 = vpop.f32.mrf.mxu0
  %v549 = vadd.f32 %v433, %v548
  %v550 = vand.u32 %v20, 4294901760
  %v551 = vsub.f32 %v20, %v550
  %v552 = vand.u32 %v551, 4294901760
  %553 = vmatmul.f32.gmra.mxu0 %v552
  %v554 = vpop.f32.mrf.mxu0
  %v555 = vadd.f32 %v438, %v554
  %v556 = vand.u32 %v21, 4294901760
  %v557 = vsub.f32 %v21, %v556
  %v558 = vand.u32 %v557, 4294901760
  %559 = vmatmul.f32.gmra.mxu0 %v558
  %v560 = vpop.f32.mrf.mxu0
  %v561 = vadd.f32 %v443, %v560
  %v562 = vand.u32 %v22, 4294901760
  %v563 = vsub.f32 %v22, %v562
  %v564 = vand.u32 %v563, 4294901760
  %565 = vmatmul.f32.gmra.mxu0 %v564
  %v566 = vpop.f32.mrf.mxu0
  %v567 = vadd.f32 %v448, %v566
  %v568 = vand.u32 %v23, 4294901760
  %v569 = vsub.f32 %v23, %v568
  %v570 = vand.u32 %v569, 4294901760
  %571 = vmatmul.f32.gmra.mxu0 %v570
  %v572 = vpop.f32.mrf.mxu0
  %v573 = vadd.f32 %v453, %v572
  %v574 = vand.u32 %v24, 4294901760
  %v575 = vsub.f32 %v24, %v574
  %v576 = vand.u32 %v575, 4294901760
  %577 = vmatmul.f32.gmra.mxu0 %v576
  %v578 = vpop.f32.mrf.mxu0
  %v579 = vadd.f32 %v458, %v578
  %v580 = vand.u32 %v25, 4294901760
  %v581 = vsub.f32 %v25, %v580
  %v582 = vand.u32 %v581, 4294901760
  %583 = vmatmul.f32.gmra.mxu0 %v582
  %v584 = vpop.f32.mrf.mxu0
  %v585 = vadd.f32 %v463, %v584
  %v586 = vand.u32 %v26, 4294901760
  %v587 = vsub.f32 %v26, %v586
  %v588 = vand.u32 %v587, 4294901760
  %589 = vmatmul.f32.gmra.mxu0 %v588
  %v590 = vpop.f32.mrf.mxu0
  %v591 = vadd.f32 %v468, %v590
  %v592 = vand.u32 %v27, 4294901760
  %v593 = vsub.f32 %v27, %v592
  %v594 = vand.u32 %v593, 4294901760
  %595 = vmatmul.f32.gmra.mxu0 %v594
  %v596 = vpop.f32.mrf.mxu0
  %v597 = vadd.f32 %v473, %v596
  %v598 = vand.u32 %v28, 4294901760
  %v599 = vsub.f32 %v28, %v598
  %v600 = vand.u32 %v599, 4294901760
  %601 = vmatmul.f32.gmra.mxu0 %v600
  %v602 = vpop.f32.mrf.mxu0
  %v603 = vadd.f32 %v478, %v602
  %v604 = vand.u32 %v29, 4294901760
  %v605 = vsub.f32 %v29, %v604
  %v606 = vand.u32 %v605, 4294901760
  %607 = vmatmul.f32.gmra.mxu0 %v606
  %v608 = vpop.f32.mrf.mxu0
  %v609 = vadd.f32 %v483, %v608
  %v610 = vand.u32 %v30, 4294901760
  %v611 = vsub.f32 %v30, %v610
  %v612 = vand.u32 %v611, 4294901760
  %613 = vmatmul.f32.gmra.mxu0 %v612
  %v614 = vpop.f32.mrf.mxu0
  %v615 = vadd.f32 %v488, %v614
  %v616 = vand.u32 %v31, 4294901760
  %v617 = vsub.f32 %v31, %v616
  %v618 = vand.u32 %v617, 4294901760
  %619 = vmatmul.f32.gmra.mxu0 %v618
  %v620 = vpop.f32.mrf.mxu0
  %v621 = vadd.f32 %v493, %v620
  %v622 = vand.u32 %v32, 4294901760
  %v623 = vsub.f32 %v32, %v622
  %v624 = vand.u32 %v623, 4294901760
  %625 = vmatmul.f32.gmra.mxu0 %v624
  %v626 = vpop.f32.mrf.mxu0
  %v627 = vadd.f32 %v498, %v626
  %628 = vdwg.mxu0
  %v629 = vand.u32 %v48, 4294901760
  %v630 = vsub.f32 %v48, %v629
  %v631 = vand.u32 %v630, 4294901760
  %632 = vmatpush.msra.mxu0 %v631
  %v633 = vand.u32 %v47, 4294901760
  %v634 = vsub.f32 %v47, %v633
  %v635 = vand.u32 %v634, 4294901760
  %636 = vmatpush.msra.mxu0 %v635
  %v637 = vand.u32 %v46, 4294901760
  %v638 = vsub.f32 %v46, %v637
  %v639 = vand.u32 %v638, 4294901760
  %640 = vmatpush.msra.mxu0 %v639
  %v641 = vand.u32 %v45, 4294901760
  %v642 = vsub.f32 %v45, %v641
  %v643 = vand.u32 %v642, 4294901760
  %644 = vmatpush.msra.mxu0 %v643
  %v645 = vand.u32 %v44, 4294901760
  %v646 = vsub.f32 %v44, %v645
  %v647 = vand.u32 %v646, 4294901760
  %648 = vmatpush.msra.mxu0 %v647
  %v649 = vand.u32 %v43, 4294901760
  %v650 = vsub.f32 %v43, %v649
  %v651 = vand.u32 %v650, 4294901760
  %652 = vmatpush.msra.mxu0 %v651
  %v653 = vand.u32 %v42, 4294901760
  %v654 = vsub.f32 %v42, %v653
  %v655 = vand.u32 %v654, 4294901760
  %656 = vmatpush.msra.mxu0 %v655
  %v657 = vand.u32 %v41, 4294901760
  %v658 = vsub.f32 %v41, %v657
  %v659 = vand.u32 %v658, 4294901760
  %660 = vmatpush.msra.mxu0 %v659
  %v661 = vand.u32 %v40, 4294901760
  %v662 = vsub.f32 %v40, %v661
  %v663 = vand.u32 %v662, 4294901760
  %664 = vmatpush.msra.mxu0 %v663
  %v665 = vand.u32 %v39, 4294901760
  %v666 = vsub.f32 %v39, %v665
  %v667 = vand.u32 %v666, 4294901760
  %668 = vmatpush.msra.mxu0 %v667
  %v669 = vand.u32 %v38, 4294901760
  %v670 = vsub.f32 %v38, %v669
  %v671 = vand.u32 %v670, 4294901760
  %672 = vmatpush.msra.mxu0 %v671
  %v673 = vand.u32 %v37, 4294901760
  %v674 = vsub.f32 %v37, %v673
  %v675 = vand.u32 %v674, 4294901760
  %676 = vmatpush.msra.mxu0 %v675
  %v677 = vand.u32 %v36, 4294901760
  %v678 = vsub.f32 %v36, %v677
  %v679 = vand.u32 %v678, 4294901760
  %680 = vmatpush.msra.mxu0 %v679
  %v681 = vand.u32 %v35, 4294901760
  %v682 = vsub.f32 %v35, %v681
  %v683 = vand.u32 %v682, 4294901760
  %684 = vmatpush.msra.mxu0 %v683
  %v685 = vand.u32 %v34, 4294901760
  %v686 = vsub.f32 %v34, %v685
  %v687 = vand.u32 %v686, 4294901760
  %688 = vmatpush.msra.mxu0 %v687
  %v689 = vand.u32 %v33, 4294901760
  %v690 = vsub.f32 %v33, %v689
  %v691 = vand.u32 %v690, 4294901760
  %692 = vmatpush.msra.mxu0 %v691
  %v693 = vand.u32 %v17, 4294901760
  %694 = vmatmul.f32.gmra.mxu0 %v693
  %v695 = vpop.f32.mrf.mxu0
  %v696 = vadd.f32 %v537, %v695
  %v697 = vand.u32 %v18, 4294901760
  %698 = vmatmul.f32.gmra.mxu0 %v697
  %v699 = vpop.f32.mrf.mxu0
  %v700 = vadd.f32 %v543, %v699
  %v701 = vand.u32 %v19, 4294901760
  %702 = vmatmul.f32.gmra.mxu0 %v701
  %v703 = vpop.f32.mrf.mxu0
  %v704 = vadd.f32 %v549, %v703
  %v705 = vand.u32 %v20, 4294901760
  %706 = vmatmul.f32.gmra.mxu0 %v705
  %v707 = vpop.f32.mrf.mxu0
  %v708 = vadd.f32 %v555, %v707
  %v709 = vand.u32 %v21, 4294901760
  %710 = vmatmul.f32.gmra.mxu0 %v709
  %v711 = vpop.f32.mrf.mxu0
  %v712 = vadd.f32 %v561, %v711
  %v713 = vand.u32 %v22, 4294901760
  %714 = vmatmul.f32.gmra.mxu0 %v713
  %v715 = vpop.f32.mrf.mxu0
  %v716 = vadd.f32 %v567, %v715
  %v717 = vand.u32 %v23, 4294901760
  %718 = vmatmul.f32.gmra.mxu0 %v717
  %v719 = vpop.f32.mrf.mxu0
  %v720 = vadd.f32 %v573, %v719
  %v721 = vand.u32 %v24, 4294901760
  %722 = vmatmul.f32.gmra.mxu0 %v721
  %v723 = vpop.f32.mrf.mxu0
  %v724 = vadd.f32 %v579, %v723
  %v725 = vand.u32 %v25, 4294901760
  %726 = vmatmul.f32.gmra.mxu0 %v725
  %v727 = vpop.f32.mrf.mxu0
  %v728 = vadd.f32 %v585, %v727
  %v729 = vand.u32 %v26, 4294901760
  %730 = vmatmul.f32.gmra.mxu0 %v729
  %v731 = vpop.f32.mrf.mxu0
  %v732 = vadd.f32 %v591, %v731
  %v733 = vand.u32 %v27, 4294901760
  %734 = vmatmul.f32.gmra.mxu0 %v733
  %v735 = vpop.f32.mrf.mxu0
  %v736 = vadd.f32 %v597, %v735
  %v737 = vand.u32 %v28, 4294901760
  %738 = vmatmul.f32.gmra.mxu0 %v737
  %v739 = vpop.f32.mrf.mxu0
  %v740 = vadd.f32 %v603, %v739
  %v741 = vand.u32 %v29, 4294901760
  %742 = vmatmul.f32.gmra.mxu0 %v741
  %v743 = vpop.f32.mrf.mxu0
  %v744 = vadd.f32 %v609, %v743
  %v745 = vand.u32 %v30, 4294901760
  %746 = vmatmul.f32.gmra.mxu0 %v745
  %v747 = vpop.f32.mrf.mxu0
  %v748 = vadd.f32 %v615, %v747
  %v749 = vand.u32 %v31, 4294901760
  %750 = vmatmul.f32.gmra.mxu0 %v749
  %v751 = vpop.f32.mrf.mxu0
  %v752 = vadd.f32 %v621, %v751
  %v753 = vand.u32 %v32, 4294901760
  %754 = vmatmul.f32.gmra.mxu0 %v753
  %v755 = vpop.f32.mrf.mxu0
  %v756 = vadd.f32 %v627, %v755
  %757 = vdwg.mxu0
  %v758 = vand.u32 %v48, 4294901760
  %759 = vmatpush.msra.mxu0 %v758
  %v760 = vand.u32 %v47, 4294901760
  %761 = vmatpush.msra.mxu0 %v760
  %v762 = vand.u32 %v46, 4294901760
  %763 = vmatpush.msra.mxu0 %v762
  %v764 = vand.u32 %v45, 4294901760
  %765 = vmatpush.msra.mxu0 %v764
  %v766 = vand.u32 %v44, 4294901760
  %767 = vmatpush.msra.mxu0 %v766
  %v768 = vand.u32 %v43, 4294901760
  %769 = vmatpush.msra.mxu0 %v768
  %v770 = vand.u32 %v42, 4294901760
  %771 = vmatpush.msra.mxu0 %v770
  %v772 = vand.u32 %v41, 4294901760
  %773 = vmatpush.msra.mxu0 %v772
  %v774 = vand.u32 %v40, 4294901760
  %775 = vmatpush.msra.mxu0 %v774
  %v776 = vand.u32 %v39, 4294901760
  %777 = vmatpush.msra.mxu0 %v776
  %v778 = vand.u32 %v38, 4294901760
  %779 = vmatpush.msra.mxu0 %v778
  %v780 = vand.u32 %v37, 4294901760
  %781 = vmatpush.msra.mxu0 %v780
  %v782 = vand.u32 %v36, 4294901760
  %783 = vmatpush.msra.mxu0 %v782
  %v784 = vand.u32 %v35, 4294901760
  %785 = vmatpush.msra.mxu0 %v784
  %v786 = vand.u32 %v34, 4294901760
  %787 = vmatpush.msra.mxu0 %v786
  %v788 = vand.u32 %v33, 4294901760
  %789 = vmatpush.msra.mxu0 %v788
  %v790 = vand.u32 %v17, 4294901760
  %791 = vmatmul.f32.gmra.mxu0 %v790
  %v792 = vpop.f32.mrf.mxu0
  %v793 = vadd.f32 %v696, %v792
  %v794 = vand.u32 %v18, 4294901760
  %795 = vmatmul.f32.gmra.mxu0 %v794
  %v796 = vpop.f32.mrf.mxu0
  %v797 = vadd.f32 %v700, %v796
  %v798 = vand.u32 %v19, 4294901760
  %799 = vmatmul.f32.gmra.mxu0 %v798
  %v800 = vpop.f32.mrf.mxu0
  %v801 = vadd.f32 %v704, %v800
  %v802 = vand.u32 %v20, 4294901760
  %803 = vmatmul.f32.gmra.mxu0 %v802
  %v804 = vpop.f32.mrf.mxu0
  %v805 = vadd.f32 %v708, %v804
  %v806 = vand.u32 %v21, 4294901760
  %807 = vmatmul.f32.gmra.mxu0 %v806
  %v808 = vpop.f32.mrf.mxu0
  %v809 = vadd.f32 %v712, %v808
  %v810 = vand.u32 %v22, 4294901760
  %811 = vmatmul.f32.gmra.mxu0 %v810
  %v812 = vpop.f32.mrf.mxu0
  %v813 = vadd.f32 %v716, %v812
  %v814 = vand.u32 %v23, 4294901760
  %815 = vmatmul.f32.gmra.mxu0 %v814
  %v816 = vpop.f32.mrf.mxu0
  %v817 = vadd.f32 %v720, %v816
  %v818 = vand.u32 %v24, 4294901760
  %819 = vmatmul.f32.gmra.mxu0 %v818
  %v820 = vpop.f32.mrf.mxu0
  %v821 = vadd.f32 %v724, %v820
  %v822 = vand.u32 %v25, 4294901760
  %823 = vmatmul.f32.gmra.mxu0 %v822
  %v824 = vpop.f32.mrf.mxu0
  %v825 = vadd.f32 %v728, %v824
  %v826 = vand.u32 %v26, 4294901760
  %827 = vmatmul.f32.gmra.mxu0 %v826
  %v828 = vpop.f32.mrf.mxu0
  %v829 = vadd.f32 %v732, %v828
  %v830 = vand.u32 %v27, 4294901760
  %831 = vmatmul.f32.gmra.mxu0 %v830
  %v832 = vpop.f32.mrf.mxu0
  %v833 = vadd.f32 %v736, %v832
  %v834 = vand.u32 %v28, 4294901760
  %835 = vmatmul.f32.gmra.mxu0 %v834
  %v836 = vpop.f32.mrf.mxu0
  %v837 = vadd.f32 %v740, %v836
  %v838 = vand.u32 %v29, 4294901760
  %839 = vmatmul.f32.gmra.mxu0 %v838
  %v840 = vpop.f32.mrf.mxu0
  %v841 = vadd.f32 %v744, %v840
  %v842 = vand.u32 %v30, 4294901760
  %843 = vmatmul.f32.gmra.mxu0 %v842
  %v844 = vpop.f32.mrf.mxu0
  %v845 = vadd.f32 %v748, %v844
  %v846 = vand.u32 %v31, 4294901760
  %847 = vmatmul.f32.gmra.mxu0 %v846
  %v848 = vpop.f32.mrf.mxu0
  %v849 = vadd.f32 %v752, %v848
  %v850 = vand.u32 %v32, 4294901760
  %851 = vmatmul.f32.gmra.mxu0 %v850
  %v852 = vpop.f32.mrf.mxu0
  %v853 = vadd.f32 %v756, %v852
  %854 = vdwg.mxu0
  %v855 = vld [vmem:[%s2] sm:$0x1]
  %v857 = vperm.slane %v855, 0
  %v859 = vmul.f32 %v793, %v857
  %v860 = vmul.f32 %v797, %v857
  %v861 = vmul.f32 %v801, %v857
  %v862 = vmul.f32 %v805, %v857
  %v863 = vmul.f32 %v809, %v857
  %v864 = vmul.f32 %v813, %v857
  %v865 = vmul.f32 %v817, %v857
  %v866 = vmul.f32 %v821, %v857
  %v867 = vmul.f32 %v825, %v857
  %v868 = vmul.f32 %v829, %v857
  %v869 = vmul.f32 %v833, %v857
  %v870 = vmul.f32 %v837, %v857
  %v871 = vmul.f32 %v841, %v857
  %v872 = vmul.f32 %v845, %v857
  %v873 = vmul.f32 %v849, %v857
  %v874 = vmul.f32 %v853, %v857
  %v875 = vld [vmem:[%s3] sm:$0x1]
  %v877 = vperm.slane %v875, 0
  %v879 = vadd.f32 %v859, %v877
  %v880 = vadd.f32 %v860, %v877
  %v881 = vadd.f32 %v861, %v877
  %v882 = vadd.f32 %v862, %v877
  %v883 = vadd.f32 %v863, %v877
  %v884 = vadd.f32 %v864, %v877
  %v885 = vadd.f32 %v865, %v877
  %v886 = vadd.f32 %v866, %v877
  %v887 = vadd.f32 %v867, %v877
  %v888 = vadd.f32 %v868, %v877
  %v889 = vadd.f32 %v869, %v877
  %v890 = vadd.f32 %v870, %v877
  %v891 = vadd.f32 %v871, %v877
  %v892 = vadd.f32 %v872, %v877
  %v893 = vadd.f32 %v873, %v877
  %v894 = vadd.f32 %v874, %v877
  %vm895 = vcmask 64512
  %896 = vst.msk [vmem:[%s4] sm:$0xff] %vm895, %v879
  %897 = vst.msk [vmem:[%s4 + $0x8] sm:$0xff] %vm895, %v880
  %898 = vst.msk [vmem:[%s4 + $0x10] sm:$0xff] %vm895, %v881
  %899 = vst.msk [vmem:[%s4 + $0x18] sm:$0xff] %vm895, %v882
  %900 = vst.msk [vmem:[%s4 + $0x20] sm:$0xff] %vm895, %v883
  %901 = vst.msk [vmem:[%s4 + $0x28] sm:$0xff] %vm895, %v884
  %902 = vst.msk [vmem:[%s4 + $0x30] sm:$0xff] %vm895, %v885
  %903 = vst.msk [vmem:[%s4 + $0x38] sm:$0xff] %vm895, %v886
  %904 = vst.msk [vmem:[%s4 + $0x40] sm:$0xff] %vm895, %v887
  %905 = vst.msk [vmem:[%s4 + $0x48] sm:$0xff] %vm895, %v888
  %906 = vst.msk [vmem:[%s4 + $0x50] sm:$0xff] %vm895, %v889
  %907 = vst.msk [vmem:[%s4 + $0x58] sm:$0xff] %vm895, %v890
  %908 = vst.msk [vmem:[%s4 + $0x60] sm:$0xff] %vm895, %v891
  %909 = vst.msk [vmem:[%s4 + $0x68] sm:$0xff] %vm895, %v892
  %910 = vst.msk [vmem:[%s4 + $0x70] sm:$0xff] %vm895, %v893
  %911 = vst.msk [vmem:[%s4 + $0x78] sm:$0xff] %vm895, %v894
  // Predicated region
  $region18: #{tpu_custom_call.1} parent=0 // pred_check
    _
  $region19: #{tpu_custom_call.1} parent=0 // pred_check_branch
    %913 = sbr.rel (0) target = $region21
  $region20: #{tpu_custom_call.1} parent=0 // pred_region
    _
  $region21: #{tpu_custom_call.1} parent=0 // pred_fallthru
    _
  // Predicated region
  $region22: #{tpu_custom_call.1} parent=0 // pred_check
    _
  $region23: #{tpu_custom_call.1} parent=0 // pred_check_branch
    %915 = sbr.rel (0) target = $region25
  $region24: #{tpu_custom_call.1} parent=0 // pred_region
    _
  $region25: #{tpu_custom_call.1} parent=0 // pred_fallthru
    _

</llo_original>
